<compile_context>
chip_gen: v5e
topology: v5e:2x2
jax: 0.10.0
libtpu: 0.0.40
codegen_flags: <defaults>
</compile_context>

<pallas_src>
import jax
import jax.numpy as jnp
from jax.experimental import pallas as pl
from jax.experimental.pallas import tpu as pltpu

_LANE = 128                    # lane width: last dim of every VMEM tile
_TILE_ROWS = 8192              # (8192, 128) f32 tile = 4 MiB
_SMALL_N_FASTPATH = 256 * 1024 # < 1 MiB of f32 -> plain jnp (fusible, no launch cost)
_VMEM_LIMIT = 32 * 1024 * 1024 # fits v5e/v6e/v7x; covers 2x(in+out) 4 MiB buffers


def _linreg_kernel(w_ref, b_ref, x_ref, o_ref):
    # Scalar weight/bias from SMEM, broadcast over the lane-dense tile.
    # Explicit cast keeps output dtype correct for non-f32 inputs.
    o_ref[...] = (x_ref[...] * w_ref[0] + b_ref[0]).astype(o_ref.dtype)


def _choose_block_rows(rows: int) -> int:
    """Pick a sublane-aligned row-block so the grid has >= 2 blocks when possible."""
    if rows <= 8:
        return rows  # single full-extent block (tiny inputs)
    half = pl.cdiv(rows, 2)
    half8 = ((half + 7) // 8) * 8  # multiple of 8 (sublane constraint)
    return min(_TILE_ROWS, half8)


def linear_regression_forward(
    x: jax.Array,
    weights: jax.Array,
    bias: jax.Array,
    *,
    min_pallas_elements: int = _SMALL_N_FASTPATH,
) -> jax.Array:
    """y = x * weights + bias  (weights, bias are shape (1,) float32 params)."""
    orig_shape = x.shape
    xf = x.reshape(-1)
    n = xf.shape[0]

    # Small-N fast path: launch/DMA overhead dominates and the custom call
    # would block XLA fusion; a plain jnp FMA is both faster and fusible.
    if n < min_pallas_elements:
        y = xf * weights[0] + bias[0]
        return y.astype(x.dtype).reshape(orig_shape)

    rows = pl.cdiv(n, _LANE)
    n_padded = rows * _LANE
    padded = n_padded != n
    if padded:
        # Pad only to the next multiple of 128 (<= 127 elements).
        xf = jnp.pad(xf, (0, n_padded - n))
    x2d = xf.reshape(rows, _LANE)  # free metadata op when not padded

    block_rows = _choose_block_rows(rows)
    grid = (pl.cdiv(rows, block_rows),)  # partial last block handled by masking

    y2d = pl.pallas_call(
        _linreg_kernel,
        out_shape=jax.ShapeDtypeStruct((rows, _LANE), x.dtype),
        grid=grid,
        in_specs=[
            pl.BlockSpec(memory_space=pltpu.MemorySpace.SMEM),    # weights (1,)
            pl.BlockSpec(memory_space=pltpu.MemorySpace.SMEM),    # bias (1,)
            pl.BlockSpec((block_rows, _LANE), lambda i: (i, 0)),  # x tile
        ],
        out_specs=pl.BlockSpec((block_rows, _LANE), lambda i: (i, 0)),
        compiler_params=pltpu.CompilerParams(
            dimension_semantics=("parallel",),   # megacore sharding on v7x
            vmem_limit_bytes=_VMEM_LIMIT,
        ),
        cost_estimate=pl.CostEstimate(
            flops=2 * n_padded,
            transcendentals=0,
            bytes_accessed=int(2 * n_padded * x.dtype.itemsize),
        ),
    )(weights, bias, x2d)

    if padded:
        return y2d.reshape(-1)[:n].reshape(orig_shape)
    return y2d.reshape(orig_shape)


if __name__ == "__main__":
    key = jax.random.PRNGKey(0)
    k_w, k_b = jax.random.split(key)

    # Deterministic parameter init (mirrors nn.Parameter(torch.rand(1))).
    weights = jax.random.uniform(k_w, (1,), dtype=jnp.float32)
    bias = jax.random.uniform(k_b, (1,), dtype=jnp.float32)

    # Module-spec input: x = torch.arange(0, 1, 0.01) -> shape (100,)
    x = jnp.arange(0.0, 1.0, 0.01, dtype=jnp.float32)
    y_ref = x * weights[0] + bias[0]

    # Default call (small-N fast path, plain jnp).
    y_fast = jax.block_until_ready(linear_regression_forward(x, weights, bias))
    assert y_fast.shape == x.shape and y_fast.dtype == x.dtype
    assert jnp.allclose(y_fast, y_ref, atol=1e-6), "mismatch (fast path)"

    # Force the Pallas kernel on the small module-spec shape (single tile).
    y_small = jax.block_until_ready(
        linear_regression_forward(x, weights, bias, min_pallas_elements=0))
    assert y_small.shape == x.shape and y_small.dtype == x.dtype
    assert jnp.allclose(y_small, y_ref, atol=1e-6), "mismatch (pallas, small N)"

    # Larger input: full 8192-row tiles, grid > 1, masked partial tail block,
    # and a <=127-element pad (non-multiple-of-128 N).
    n_big = 2 * _TILE_ROWS * _LANE + 100
    x_big = jnp.linspace(-3.0, 3.0, n_big, dtype=jnp.float32)
    y_big = jax.block_until_ready(linear_regression_forward(x_big, weights, bias))
    y_big_ref = x_big * weights[0] + bias[0]
    assert y_big.shape == x_big.shape and y_big.dtype == x_big.dtype
    assert jnp.allclose(y_big, y_big_ref, atol=1e-6), "mismatch (pallas, large N)"

    print("KERNEL_OK")
</pallas_src>

<mosaic_0001>
module attributes {stable_mosaic.version = 11 : i64} {
  func.func @_linreg_kernel(%arg0: i32, %arg1: memref<1xf32, #tpu.memory_space<smem>>, %arg2: memref<1xf32, #tpu.memory_space<smem>>, %arg3: memref<1x128xf32, #tpu.memory_space<vmem>>, %arg4: memref<1x128xf32, #tpu.memory_space<vmem>>) attributes {dimension_semantics = [#tpu.dimension_semantics<parallel>], iteration_bounds = array<i64: 1>, scalar_prefetch = 0 : i64, scratch_operands = 0 : i64, tpu.core_type = #tpu.core_type<tc>, window_params = [{transform_indices = @transform_0, window_bounds = array<i64: 1>}, {transform_indices = @transform_1, window_bounds = array<i64: 1>}, {transform_indices = @transform_2, window_bounds = array<i64: 1, 128>}, {transform_indices = @transform_3, window_bounds = array<i64: 1, 128>}]} {
    %c0 = arith.constant 0 : index
    %c0_0 = arith.constant 0 : index
    %0 = vector.load %arg3[%c0, %c0_0] : memref<1x128xf32, #tpu.memory_space<vmem>>, vector<1x128xf32>
    %c0_1 = arith.constant 0 : index
    %1 = memref.load %arg1[%c0_1] : memref<1xf32, #tpu.memory_space<smem>>
    %2 = vector.broadcast %1 : f32 to vector<1x128xf32>
    %3 = arith.mulf %0, %2 : vector<1x128xf32>
    %c0_2 = arith.constant 0 : index
    %4 = memref.load %arg2[%c0_2] : memref<1xf32, #tpu.memory_space<smem>>
    %5 = vector.broadcast %4 : f32 to vector<1x128xf32>
    %6 = arith.addf %3, %5 : vector<1x128xf32>
    %c0_3 = arith.constant 0 : index
    %c0_4 = arith.constant 0 : index
    %7 = vector.load %arg4[%c0_3, %c0_4] : memref<1x128xf32, #tpu.memory_space<vmem>>, vector<1x128xf32>
    tpu.vector_store %arg4[%c0_3, %c0_4], %6 {strides = array<i32>} : memref<1x128xf32, #tpu.memory_space<vmem>>, vector<1x128xf32>,
    return
  }
  func.func @transform_0(%arg0: i32) -> i32 {
    %c0_i32 = arith.constant 0 : i32
    %c0_i32_0 = arith.constant 0 : i32
    return %c0_i32 : i32
  }
  func.func @transform_1(%arg0: i32) -> i32 {
    %c0_i32 = arith.constant 0 : i32
    %c0_i32_0 = arith.constant 0 : i32
    return %c0_i32 : i32
  }
  func.func @transform_2(%arg0: i32) -> (i32, i32) {
    %c0_i32 = arith.constant 0 : i32
    %c0_i32_0 = arith.constant 0 : i32
    return %arg0, %c0_i32 : i32, i32
  }
  func.func @transform_3(%arg0: i32) -> (i32, i32) {
    %c0_i32 = arith.constant 0 : i32
    %c0_i32_0 = arith.constant 0 : i32
    return %arg0, %c0_i32 : i32, i32
  }
}

</mosaic_0001>

<llo_original>
// kernel: tpu_custom_call.1
$region0: #{tpu_custom_call.1}
  #allocation0 [shape = 'u32[]', space=smem, size = 0x4, offset = 0x4, fixed_abs, tag = 'smem constant byte address 0x4 - core index']
  #allocation1 [shape = 'u32[72,128]{1,0:T(1,128)}', space=vmem, size = 0x9000, scoped, tag = 'internal scratch']
  #allocation2 [shape = 'f32[1]{0:T(128)S(6)}', space=smem, size = 0x200, scoped, tag = 'scoped memory for tpu_custom_call.1']
  #allocation3 [shape = 'f32[1]{0:T(128)S(6)}', space=smem, size = 0x200, scoped, tag = 'scoped memory for tpu_custom_call.1']
  %s0 = inlined_call_operand.<no memory space> [shape: f32[1], index: 0, kind: input, shape index: {}]
  %s1 = inlined_call_operand.<no memory space> [shape: f32[1], index: 1, kind: input, shape index: {}]
  %s2 = inlined_call_operand.vmem [shape: f32[1,128], index: 2, kind: input, shape index: {}]
  %s3 = inlined_call_operand.hbm [shape: f32[1,128], index: 3, kind: output, shape index: {}]
  %s4 = sld [smem:[#allocation0]]
  $region22: #{tpu_custom_call.1} parent=0
    _
  %s6 = ssub.s32 1, %s4
  %s7 = scalar_select 0, %s6, %s4
  %8 = sst [smem:[#allocation2]] %s0
  %9 = sst [smem:[#allocation3]] %s1
  $region1: #{tpu_custom_call.1} parent=0
    #allocation4 [shape = 'u8[512]{0}', space=vmem, size = 0x400, scoped, tag = 'output window, operand 0, single buffered']
    #allocation5 [shape = 's32[1]{0}', space=sflag, size = 0x4, scoped, tag = 'scoped memory for tpu_custom_call.1']
    %10 = vsyncpa [#allocation5], 0
    // Predicated region
    $region2: #{tpu_custom_call.1} parent=1 // pred_check
      _
    $region3: #{tpu_custom_call.1} parent=1 // pred_check_branch
      %12 = sbr.rel (0) target = $region5
    $region4: #{tpu_custom_call.1} parent=1 // pred_region
      _
    $region5: #{tpu_custom_call.1} parent=1 // pred_fallthru
      _
    // Predicated region
    $region6: #{tpu_custom_call.1} parent=1 // pred_check
      _
    $region7: #{tpu_custom_call.1} parent=1 // pred_check_branch
      %14 = sbr.rel (0) target = $region9
    $region8: #{tpu_custom_call.1} parent=1 // pred_region
      _
    $region9: #{tpu_custom_call.1} parent=1 // pred_fallthru
      _
    // Predicated region
    $region10: #{tpu_custom_call.1} parent=1 // pred_check
      _
    $region11: #{tpu_custom_call.1} parent=1 // pred_check_branch
      %16 = sbr.rel (0) target = $region13
    $region12: #{tpu_custom_call.1} parent=1 // pred_region
      _
    $region13: #{tpu_custom_call.1} parent=1 // pred_fallthru
      _
    %v17 = vld [vmem:[%s2] sm:$0x1]
    %s18 = sld [smem:[#allocation2]]
    %v19 = vstv %s18
    %v20 = vmul.f32 %v17, %v19
    %s21 = sld [smem:[#allocation3]]
    %v22 = vstv %s21
    %v23 = vadd.f32 %v20, %v22
    %24 = vst [vmem:[#allocation4] sm:$0x1] %v23
    // Predicated region
    $region14: #{tpu_custom_call.1} parent=1 // pred_check
      _
    $region15: #{tpu_custom_call.1} parent=1 // pred_check_branch
      %26 = sbr.rel (0) target = $region17
    $region16: #{tpu_custom_call.1} parent=1 // pred_region
      %28 = vsyncadd [#allocation5], 0
      %s30 = sshll.u32 [#allocation4], 4
      %s31 = int_to_ptr.vmem [resolvable:$true] %s30
      %s32 = sshll.u32 %s3, 4
      %s33 = int_to_ptr.hbm [resolvable:$true] %s32
      %35 = dma.vmem_to_hbm [thread:$0]  %s31, 16, %s33, [#allocation5]
    $region17: #{tpu_custom_call.1} parent=1 // pred_fallthru
      _
    // Predicated region
    $region18: #{tpu_custom_call.1} parent=1 // pred_check
      _
    $region19: #{tpu_custom_call.1} parent=1 // pred_check_branch
      %37 = sbr.rel (0) target = $region21
    $region20: #{tpu_custom_call.1} parent=1 // pred_region
      %39 = dma.done [#allocation5], 16
    $region21: #{tpu_custom_call.1} parent=1 // pred_fallthru
      _
    %40 = vsyncpa [#allocation5], 1

</llo_original>
